<compile_context>
chip_gen: v5e
topology: v5e:2x2
jax: 0.10.0
libtpu: 0.0.40
codegen_flags: <defaults>
</compile_context>

<pallas_src>
import jax
import jax.numpy as jnp
from jax.experimental import pallas as pl
from jax.experimental.pallas import tpu as pltpu


def _mlp_kernel(xt_ref, w1_ref, b1_ref, w2_ref, b2_ref, w3_ref, b3_ref, o_ref):
    # xt tile: (D, TB) with the batch on the lane axis -> every matmul is
    # N=TB wide and the output store is lane-dense.  No transpose needed.
    xt = xt_ref[...]                                              # (D, TB)  f32 or bf16
    w1 = w1_ref[...]                                              # (64, D)  same dtype as xt
    w2 = w2_ref[...]                                              # (32, 64) same dtype as xt

    h1 = jnp.dot(w1, xt, preferred_element_type=jnp.float32) + b1_ref[...]   # (64, TB) f32
    h1 = jnp.maximum(h1, 0.0)

    h2 = jnp.dot(w2, h1.astype(w2.dtype),
                 preferred_element_type=jnp.float32) + b2_ref[...]           # (32, TB) f32
    h2 = jnp.maximum(h2, 0.0)

    # fc3 has a single output unit: VPU multiply + sublane (XLU) reduce instead
    # of an N=1 MXU matmul -> lane-dense (1, TB) result.
    out = jnp.sum(h2 * w3_ref[...], axis=0, keepdims=True) + b3_ref[...]     # (1, TB)
    o_ref[...] = out.astype(o_ref.dtype)


def linear_nn_forward(x, params, *, block_batch=2048, matmul_dtype=None):
    """Fused forward pass of LinearNN.

    x: (B, input_dim) float32.
    params layout (kernel-friendly):
      w1 (64, D), b1 (64, 1), w2 (32, 64), b2 (32, 1), w3 (32, 1), b3 (1, 1).
    Returns (B, 1) float32.
    """
    assert block_batch % 128 == 0
    w1, b1, w2, b2, w3, b3 = params
    B, D = x.shape

    def rup(n, m):
        return ((n + m - 1) // m) * m

    # Batch tile: multiple of 128 (lane-dense x block and output block).  Cap
    # it so that batches bigger than one tile's worth produce >= 2 tiles, which
    # lets the "parallel" grid axis use both TensorCores on v7x.
    tb = min(block_batch, max(128, rup((B + 1) // 2, 128)))
    bp = rup(B, tb)
    n_tiles = bp // tb

    # One upstream transpose to the lane-dense (D, B) streaming layout.
    # TODO(synk): if the producer can emit x already as (D, B), drop this.
    x_t = jnp.pad(x, ((0, bp - B), (0, 0))).T                     # (D, bp)

    if matmul_dtype is not None:
        # Cast the dominant HBM stream (and the matmul weight operands) in HBM;
        # accumulation / bias / ReLU / fc3 reduce stay f32 inside the kernel.
        x_t = x_t.astype(matmul_dtype)
        w1 = w1.astype(matmul_dtype)
        w2 = w2.astype(matmul_dtype)

    flops = 2 * bp * (D * 64 + 64 * 32 + 32)
    param_bytes = (w1.size * w1.dtype.itemsize + b1.size * 4 +
                   w2.size * w2.dtype.itemsize + b2.size * 4 +
                   w3.size * 4 + b3.size * 4)
    bytes_accessed = x_t.size * x_t.dtype.itemsize + bp * 4 + param_bytes

    def resident(a):  # weights/biases: fetched once, VMEM-resident across tiles
        return pl.BlockSpec(a.shape, lambda i: (0, 0))

    out = pl.pallas_call(
        _mlp_kernel,
        out_shape=jax.ShapeDtypeStruct((1, bp), jnp.float32),
        grid_spec=pltpu.PrefetchScalarGridSpec(
            num_scalar_prefetch=0,
            grid=(n_tiles,),
            in_specs=[
                pl.BlockSpec((D, tb), lambda i: (0, i)),   # streamed lane-dense x tiles
                resident(w1), resident(b1),
                resident(w2), resident(b2),
                resident(w3), resident(b3),
            ],
            out_specs=pl.BlockSpec((1, tb), lambda i: (0, i)),
        ),
        compiler_params=pltpu.CompilerParams(
            dimension_semantics=("parallel",)),
        cost_estimate=pl.CostEstimate(
            flops=flops, transcendentals=0, bytes_accessed=bytes_accessed),
    )(x_t, w1, b1, w2, b2, w3, b3)

    return out[0, :B][:, None]                                   # (B, 1)


def init_params(key, input_dim):
    """Init matching nn.Linear (uniform +/- 1/sqrt(fan_in)) in kernel layout."""
    dims = [(input_dim, 64), (64, 32), (32, 1)]
    params = []
    for layer, (fan_in, fan_out) in enumerate(dims):
        key, kw, kb = jax.random.split(key, 3)
        bound = float(fan_in) ** -0.5
        w = jax.random.uniform(kw, (fan_out, fan_in), jnp.float32, -bound, bound)
        b = jax.random.uniform(kb, (fan_out, 1), jnp.float32, -bound, bound)
        if layer == 2:                    # fc3: store as (32, 1) for the VPU reduce
            w = w.T
        params += [w, b]
    return params


def reference_forward(x, params):
    """Pure-JAX reference at highest matmul precision."""
    w1, b1, w2, b2, w3, b3 = params
    hp = jax.lax.Precision.HIGHEST
    h1 = jnp.maximum(jnp.dot(x, w1.T, precision=hp) + b1[:, 0], 0.0)
    h2 = jnp.maximum(jnp.dot(h1, w2.T, precision=hp) + b2[:, 0], 0.0)
    return jnp.dot(h2, w3, precision=hp) + b3


if __name__ == "__main__":
    key = jax.random.PRNGKey(0)
    k_x, k_p, k_x2 = jax.random.split(key, 3)

    batch, input_dim = 8, 16  # small shapes consistent with a tabular regressor
    x = jax.random.normal(k_x, (batch, input_dim), jnp.float32)
    params = init_params(k_p, input_dim)

    out = jax.block_until_ready(linear_nn_forward(x, params))
    ref = reference_forward(x, params)
    assert out.shape == (batch, 1)
    # Tolerance accommodates the MXU's default (reduced-precision) f32 matmul path.
    assert jnp.allclose(out, ref, atol=2e-2, rtol=2e-2)

    # Larger batch exercises the multi-tile grid (>= 2 tiles for v7x) + padding.
    big = 2500
    x2 = jax.random.normal(k_x2, (big, input_dim), jnp.float32)
    out2 = jax.block_until_ready(linear_nn_forward(x2, params))
    ref2 = reference_forward(x2, params)
    assert out2.shape == (big, 1)
    assert jnp.allclose(out2, ref2, atol=2e-2, rtol=2e-2)

    # bf16 matmul-operand path (x/w1/w2 streamed as bf16, f32 accumulate/bias/ReLU),
    # validated separately with its own (looser) tolerance.
    out3 = jax.block_until_ready(
        linear_nn_forward(x2, params, matmul_dtype=jnp.bfloat16))
    assert out3.shape == (big, 1)
    assert jnp.allclose(out3, ref2, atol=1e-1, rtol=1e-1)

    print("KERNEL_OK")
</pallas_src>

<mosaic_0001>
module attributes {stable_mosaic.version = 11 : i64} {
  func.func @_mlp_kernel(%arg0: i32, %arg1: memref<16x128xf32, #tpu.memory_space<vmem>>, %arg2: memref<64x16xf32, #tpu.memory_space<vmem>>, %arg3: memref<64x1xf32, #tpu.memory_space<vmem>>, %arg4: memref<32x64xf32, #tpu.memory_space<vmem>>, %arg5: memref<32x1xf32, #tpu.memory_space<vmem>>, %arg6: memref<32x1xf32, #tpu.memory_space<vmem>>, %arg7: memref<1x1xf32, #tpu.memory_space<vmem>>, %arg8: memref<1x128xf32, #tpu.memory_space<vmem>>) attributes {dimension_semantics = [#tpu.dimension_semantics<parallel>], iteration_bounds = array<i64: 1>, scalar_prefetch = 0 : i64, scratch_operands = 0 : i64, tpu.core_type = #tpu.core_type<tc>, window_params = [{transform_indices = @transform_0, window_bounds = array<i64: 16, 128>}, {pipeline_mode = #tpu.pipeline_mode<synchronous>, transform_indices = @transform_1, window_bounds = array<i64: 64, 16>}, {pipeline_mode = #tpu.pipeline_mode<synchronous>, transform_indices = @transform_2, window_bounds = array<i64: 64, 1>}, {pipeline_mode = #tpu.pipeline_mode<synchronous>, transform_indices = @transform_3, window_bounds = array<i64: 32, 64>}, {pipeline_mode = #tpu.pipeline_mode<synchronous>, transform_indices = @transform_4, window_bounds = array<i64: 32, 1>}, {pipeline_mode = #tpu.pipeline_mode<synchronous>, transform_indices = @transform_5, window_bounds = array<i64: 32, 1>}, {pipeline_mode = #tpu.pipeline_mode<synchronous>, transform_indices = @transform_6, window_bounds = array<i64: 1, 1>}, {transform_indices = @transform_7, window_bounds = array<i64: 1, 128>}]} {
    %c0 = arith.constant 0 : index
    %c0_0 = arith.constant 0 : index
    %0 = vector.load %arg1[%c0, %c0_0] : memref<16x128xf32, #tpu.memory_space<vmem>>, vector<16x128xf32>
    %c0_1 = arith.constant 0 : index
    %c0_2 = arith.constant 0 : index
    %1 = vector.load %arg2[%c0_1, %c0_2] : memref<64x16xf32, #tpu.memory_space<vmem>>, vector<64x16xf32>
    %c0_3 = arith.constant 0 : index
    %c0_4 = arith.constant 0 : index
    %2 = vector.load %arg4[%c0_3, %c0_4] : memref<32x64xf32, #tpu.memory_space<vmem>>, vector<32x64xf32>
    %cst = arith.constant dense<0.000000e+00> : vector<64x128xf32>
    %3 = tpu.matmul %1, %0, %cst {dimension_numbers = #tpu.dot_dimension_numbers<[1], [0], [0], [1], [0, 0, 1, 1], [], []>} : vector<64x16xf32>, vector<16x128xf32>, vector<64x128xf32> -> vector<64x128xf32>
    %c0_5 = arith.constant 0 : index
    %c0_6 = arith.constant 0 : index
    %4 = vector.load %arg3[%c0_5, %c0_6] : memref<64x1xf32, #tpu.memory_space<vmem>>, vector<64x1xf32>
    %5 = vector.broadcast %4 : vector<64x1xf32> to vector<64x128xf32>
    %6 = arith.addf %3, %5 : vector<64x128xf32>
    %cst_7 = arith.constant 0.000000e+00 : f32
    %7 = vector.broadcast %cst_7 : f32 to vector<64x128xf32>
    %8 = arith.maximumf %6, %7 : vector<64x128xf32>
    %cst_8 = arith.constant dense<0.000000e+00> : vector<32x128xf32>
    %9 = tpu.matmul %2, %8, %cst_8 {dimension_numbers = #tpu.dot_dimension_numbers<[1], [0], [0], [1], [0, 0, 1, 1], [], []>} : vector<32x64xf32>, vector<64x128xf32>, vector<32x128xf32> -> vector<32x128xf32>
    %c0_9 = arith.constant 0 : index
    %c0_10 = arith.constant 0 : index
    %10 = vector.load %arg5[%c0_9, %c0_10] : memref<32x1xf32, #tpu.memory_space<vmem>>, vector<32x1xf32>
    %11 = vector.broadcast %10 : vector<32x1xf32> to vector<32x128xf32>
    %12 = arith.addf %9, %11 : vector<32x128xf32>
    %cst_11 = arith.constant 0.000000e+00 : f32
    %13 = vector.broadcast %cst_11 : f32 to vector<32x128xf32>
    %14 = arith.maximumf %12, %13 : vector<32x128xf32>
    %c0_12 = arith.constant 0 : index
    %c0_13 = arith.constant 0 : index
    %15 = vector.load %arg6[%c0_12, %c0_13] : memref<32x1xf32, #tpu.memory_space<vmem>>, vector<32x1xf32>
    %16 = vector.broadcast %15 : vector<32x1xf32> to vector<32x128xf32>
    %17 = arith.mulf %14, %16 : vector<32x128xf32>
    %cst_14 = arith.constant dense<0.000000e+00> : vector<128xf32>
    %18 = vector.multi_reduction <add>, %17, %cst_14 [0] : vector<32x128xf32> to vector<128xf32>
    %19 = vector.shape_cast %18 : vector<128xf32> to vector<1x128xf32>
    %c0_15 = arith.constant 0 : index
    %c0_16 = arith.constant 0 : index
    %20 = vector.load %arg7[%c0_15, %c0_16] : memref<1x1xf32, #tpu.memory_space<vmem>>, vector<1x1xf32>
    %21 = vector.broadcast %20 : vector<1x1xf32> to vector<1x128xf32>
    %22 = arith.addf %19, %21 : vector<1x128xf32>
    %c0_17 = arith.constant 0 : index
    %c0_18 = arith.constant 0 : index
    %23 = vector.load %arg8[%c0_17, %c0_18] : memref<1x128xf32, #tpu.memory_space<vmem>>, vector<1x128xf32>
    tpu.vector_store %arg8[%c0_17, %c0_18], %22 {strides = array<i32>} : memref<1x128xf32, #tpu.memory_space<vmem>>, vector<1x128xf32>,
    return
  }
  func.func @transform_0(%arg0: i32) -> (i32, i32) {
    %c0_i32 = arith.constant 0 : i32
    %c0_i32_0 = arith.constant 0 : i32
    return %c0_i32, %arg0 : i32, i32
  }
  func.func @transform_1(%arg0: i32) -> (i32, i32) {
    %c0_i32 = arith.constant 0 : i32
    %c0_i32_0 = arith.constant 0 : i32
    %c0_i32_1 = arith.constant 0 : i32
    return %c0_i32, %c0_i32_0 : i32, i32
  }
  func.func @transform_2(%arg0: i32) -> (i32, i32) {
    %c0_i32 = arith.constant 0 : i32
    %c0_i32_0 = arith.constant 0 : i32
    %c0_i32_1 = arith.constant 0 : i32
    return %c0_i32, %c0_i32_0 : i32, i32
  }
  func.func @transform_3(%arg0: i32) -> (i32, i32) {
    %c0_i32 = arith.constant 0 : i32
    %c0_i32_0 = arith.constant 0 : i32
    %c0_i32_1 = arith.constant 0 : i32
    return %c0_i32, %c0_i32_0 : i32, i32
  }
  func.func @transform_4(%arg0: i32) -> (i32, i32) {
    %c0_i32 = arith.constant 0 : i32
    %c0_i32_0 = arith.constant 0 : i32
    %c0_i32_1 = arith.constant 0 : i32
    return %c0_i32, %c0_i32_0 : i32, i32
  }
  func.func @transform_5(%arg0: i32) -> (i32, i32) {
    %c0_i32 = arith.constant 0 : i32
    %c0_i32_0 = arith.constant 0 : i32
    %c0_i32_1 = arith.constant 0 : i32
    return %c0_i32, %c0_i32_0 : i32, i32
  }
  func.func @transform_6(%arg0: i32) -> (i32, i32) {
    %c0_i32 = arith.constant 0 : i32
    %c0_i32_0 = arith.constant 0 : i32
    %c0_i32_1 = arith.constant 0 : i32
    return %c0_i32, %c0_i32_0 : i32, i32
  }
  func.func @transform_7(%arg0: i32) -> (i32, i32) {
    %c0_i32 = arith.constant 0 : i32
    %c0_i32_0 = arith.constant 0 : i32
    return %c0_i32, %arg0 : i32, i32
  }
}

</mosaic_0001>

<llo_original>
// kernel: tpu_custom_call.1
$region0: #{tpu_custom_call.1}
  #allocation0 [shape = 'u32[]', space=smem, size = 0x4, offset = 0x4, fixed_abs, tag = 'smem constant byte address 0x4 - core index']
  #allocation1 [shape = 'u32[72,128]{1,0:T(1,128)}', space=vmem, size = 0x9000, scoped, tag = 'internal scratch']
  #allocation2 [shape = 'f32[1,1]{1,0:T(1,128)S(1)}', space=vmem, size = 0x200, scoped, tag = 'scoped memory for tpu_custom_call.1']
  %s0 = inlined_call_operand.vmem [shape: f32[16,128], index: 0, kind: input, shape index: {}]
  %s1 = inlined_call_operand.vmem [shape: f32[64,16], index: 1, kind: input, shape index: {}]
  %s2 = inlined_call_operand.vmem [shape: f32[64,1], index: 2, kind: input, shape index: {}]
  %s3 = inlined_call_operand.vmem [shape: f32[32,64], index: 3, kind: input, shape index: {}]
  %s4 = inlined_call_operand.vmem [shape: f32[32,1], index: 4, kind: input, shape index: {}]
  %s5 = inlined_call_operand.vmem [shape: f32[32,1], index: 5, kind: input, shape index: {}]
  %s6 = inlined_call_operand.<no memory space> [shape: f32[1,1], index: 6, kind: input, shape index: {}]
  %s7 = inlined_call_operand.hbm [shape: f32[1,128], index: 7, kind: output, shape index: {}]
  %s8 = sld [smem:[#allocation0]]
  $region38: #{tpu_custom_call.1} parent=0
    _
  %s10 = ssub.s32 1, %s8
  %s11 = scalar_select 0, %s10, %s8
  %v12 = vstv %s6
  %13 = vst [vmem:[#allocation2] sm:$0x1] %v12
  $region1: #{tpu_custom_call.1} parent=0
    #allocation3 [shape = 'u8[512]{0}', space=vmem, size = 0x400, scoped, tag = 'output window, operand 0, single buffered']
    #allocation4 [shape = 's32[1]{0}', space=sflag, size = 0x4, scoped, tag = 'scoped memory for tpu_custom_call.1']
    %14 = vsyncpa [#allocation4], 0
    // Predicated region
    $region2: #{tpu_custom_call.1} parent=1 // pred_check
      _
    $region3: #{tpu_custom_call.1} parent=1 // pred_check_branch
      %16 = sbr.rel (0) target = $region5
    $region4: #{tpu_custom_call.1} parent=1 // pred_region
      _
    $region5: #{tpu_custom_call.1} parent=1 // pred_fallthru
      _
    // Predicated region
    $region6: #{tpu_custom_call.1} parent=1 // pred_check
      _
    $region7: #{tpu_custom_call.1} parent=1 // pred_check_branch
      %18 = sbr.rel (0) target = $region9
    $region8: #{tpu_custom_call.1} parent=1 // pred_region
      _
    $region9: #{tpu_custom_call.1} parent=1 // pred_fallthru
      _
    // Predicated region
    $region10: #{tpu_custom_call.1} parent=1 // pred_check
      _
    $region11: #{tpu_custom_call.1} parent=1 // pred_check_branch
      %20 = sbr.rel (0) target = $region13
    $region12: #{tpu_custom_call.1} parent=1 // pred_region
      _
    $region13: #{tpu_custom_call.1} parent=1 // pred_fallthru
      _
    // Predicated region
    $region14: #{tpu_custom_call.1} parent=1 // pred_check
      _
    $region15: #{tpu_custom_call.1} parent=1 // pred_check_branch
      %22 = sbr.rel (0) target = $region17
    $region16: #{tpu_custom_call.1} parent=1 // pred_region
      _
    $region17: #{tpu_custom_call.1} parent=1 // pred_fallthru
      _
    // Predicated region
    $region18: #{tpu_custom_call.1} parent=1 // pred_check
      _
    $region19: #{tpu_custom_call.1} parent=1 // pred_check_branch
      %24 = sbr.rel (0) target = $region21
    $region20: #{tpu_custom_call.1} parent=1 // pred_region
      _
    $region21: #{tpu_custom_call.1} parent=1 // pred_fallthru
      _
    // Predicated region
    $region22: #{tpu_custom_call.1} parent=1 // pred_check
      _
    $region23: #{tpu_custom_call.1} parent=1 // pred_check_branch
      %26 = sbr.rel (0) target = $region25
    $region24: #{tpu_custom_call.1} parent=1 // pred_region
      _
    $region25: #{tpu_custom_call.1} parent=1 // pred_fallthru
      _
    // Predicated region
    $region26: #{tpu_custom_call.1} parent=1 // pred_check
      _
    $region27: #{tpu_custom_call.1} parent=1 // pred_check_branch
      %28 = sbr.rel (0) target = $region29
    $region28: #{tpu_custom_call.1} parent=1 // pred_region
      _
    $region29: #{tpu_custom_call.1} parent=1 // pred_fallthru
      _
    %v29 = vld [vmem:[%s0] sm:$0xff]
    %v30 = vld [vmem:[%s0 + $0x8] sm:$0xff]
    %v31 = vld [vmem:[%s1] sm:$0xff]
    %v32 = vld [vmem:[%s1 + $0x8] sm:$0xff]
    %v33 = vld [vmem:[%s1 + $0x10] sm:$0xff]
    %v34 = vld [vmem:[%s1 + $0x18] sm:$0xff]
    %v35 = vld [vmem:[%s1 + $0x20] sm:$0xff]
    %v36 = vld [vmem:[%s1 + $0x28] sm:$0xff]
    %v37 = vld [vmem:[%s1 + $0x30] sm:$0xff]
    %v38 = vld [vmem:[%s1 + $0x38] sm:$0xff]
    %v39 = vld [vmem:[%s3] sm:$0xff]
    %v40 = vld [vmem:[%s3 + $0x8] sm:$0xff]
    %v41 = vld [vmem:[%s3 + $0x10] sm:$0xff]
    %v42 = vld [vmem:[%s3 + $0x18] sm:$0xff]
    %v43 = vld [vmem:[%s2] sm:$0xff]
    %v44 = vld [vmem:[%s2 + $0x8] sm:$0xff]
    %v45 = vld [vmem:[%s2 + $0x10] sm:$0xff]
    %v46 = vld [vmem:[%s2 + $0x18] sm:$0xff]
    %v47 = vld [vmem:[%s2 + $0x20] sm:$0xff]
    %v48 = vld [vmem:[%s2 + $0x28] sm:$0xff]
    %v49 = vld [vmem:[%s2 + $0x30] sm:$0xff]
    %v50 = vld [vmem:[%s2 + $0x38] sm:$0xff]
    %52 = vset.pattern.permute.xlu0 0
    %53 = vperm.xlu0 %52, %v43
    %v54 = vpop.permute.xlu0 %53
    %57 = vset.pattern.permute.xlu0 0
    %58 = vperm.xlu0 %57, %v44
    %v59 = vpop.permute.xlu0 %58
    %62 = vset.pattern.permute.xlu0 0
    %63 = vperm.xlu0 %62, %v45
    %v64 = vpop.permute.xlu0 %63
    %67 = vset.pattern.permute.xlu0 0
    %68 = vperm.xlu0 %67, %v46
    %v69 = vpop.permute.xlu0 %68
    %72 = vset.pattern.permute.xlu0 0
    %73 = vperm.xlu0 %72, %v47
    %v74 = vpop.permute.xlu0 %73
    %77 = vset.pattern.permute.xlu0 0
    %78 = vperm.xlu0 %77, %v48
    %v79 = vpop.permute.xlu0 %78
    %82 = vset.pattern.permute.xlu0 0
    %83 = vperm.xlu0 %82, %v49
    %v84 = vpop.permute.xlu0 %83
    %87 = vset.pattern.permute.xlu0 0
    %88 = vperm.xlu0 %87, %v50
    %v89 = vpop.permute.xlu0 %88
    %vm91 = vcmask 130048
    %v93 = vsel %vm91, %v31, 0
    %v96 = vsel %vm91, %v32, 0
    %v99 = vsel %vm91, %v33, 0
    %v102 = vsel %vm91, %v34, 0
    %v105 = vsel %vm91, %v35, 0
    %v108 = vsel %vm91, %v36, 0
    %v111 = vsel %vm91, %v37, 0
    %v114 = vsel %vm91, %v38, 0
    %116 = vmatpush.msra.mxu0 0.0
    %117 = vmatpush.msra.mxu0 0.0
    %118 = vmatpush.msra.mxu0 0.0
    %119 = vmatpush.msra.mxu0 0.0
    %120 = vmatpush.msra.mxu0 0.0
    %121 = vmatpush.msra.mxu0 0.0
    %122 = vmatpush.msra.mxu0 0.0
    %123 = vmatpush.msra.mxu0 0.0
    %124 = vmatpush.msra.mxu0 0.0
    %125 = vmatpush.msra.mxu0 0.0
    %126 = vmatpush.msra.mxu0 0.0
    %127 = vmatpush.msra.mxu0 0.0
    %128 = vmatpush.msra.mxu0 0.0
    %129 = vmatpush.msra.mxu0 0.0
    %130 = vmatpush.msra.mxu0 %v30
    %131 = vmatpush.msra.mxu0 %v29
    %132 = vmatmul.f32.gmra.mxu0 %v93
    %v133 = vpop.f32.mrf.mxu0
    %v134 = vadd.f32 %v54, %v133
    %135 = vmatmul.f32.gmra.mxu0 %v96
    %v136 = vpop.f32.mrf.mxu0
    %v137 = vadd.f32 %v59, %v136
    %138 = vmatmul.f32.gmra.mxu0 %v99
    %v139 = vpop.f32.mrf.mxu0
    %v140 = vadd.f32 %v64, %v139
    %141 = vmatmul.f32.gmra.mxu0 %v102
    %v142 = vpop.f32.mrf.mxu0
    %v143 = vadd.f32 %v69, %v142
    %144 = vmatmul.f32.gmra.mxu0 %v105
    %v145 = vpop.f32.mrf.mxu0
    %v146 = vadd.f32 %v74, %v145
    %147 = vmatmul.f32.gmra.mxu0 %v108
    %v148 = vpop.f32.mrf.mxu0
    %v149 = vadd.f32 %v79, %v148
    %150 = vmatmul.f32.gmra.mxu0 %v111
    %v151 = vpop.f32.mrf.mxu0
    %v152 = vadd.f32 %v84, %v151
    %153 = vmatmul.f32.gmra.mxu0 %v114
    %v154 = vpop.f32.mrf.mxu0
    %v155 = vadd.f32 %v89, %v154
    %156 = vdwg.mxu0
    %v157 = vmax.f32 %v134, 0.0
    %v158 = vmax.f32 %v137, 0.0
    %v159 = vmax.f32 %v140, 0.0
    %v160 = vmax.f32 %v143, 0.0
    %v161 = vmax.f32 %v146, 0.0
    %v162 = vmax.f32 %v149, 0.0
    %v163 = vmax.f32 %v152, 0.0
    %v164 = vmax.f32 %v155, 0.0
    %v165 = vld [vmem:[%s4] sm:$0xff]
    %v166 = vld [vmem:[%s4 + $0x8] sm:$0xff]
    %v167 = vld [vmem:[%s4 + $0x10] sm:$0xff]
    %v168 = vld [vmem:[%s4 + $0x18] sm:$0xff]
    %170 = vset.pattern.permute.xlu0 0
    %171 = vperm.xlu0 %170, %v165
    %v172 = vpop.permute.xlu0 %171
    %175 = vset.pattern.permute.xlu0 0
    %176 = vperm.xlu0 %175, %v166
    %v177 = vpop.permute.xlu0 %176
    %180 = vset.pattern.permute.xlu0 0
    %181 = vperm.xlu0 %180, %v167
    %v182 = vpop.permute.xlu0 %181
    %185 = vset.pattern.permute.xlu0 0
    %186 = vperm.xlu0 %185, %v168
    %v187 = vpop.permute.xlu0 %186
    %vm189 = vcmask 523264
    %v191 = vsel %vm189, %v39, 0
    %v194 = vsel %vm189, %v40, 0
    %v197 = vsel %vm189, %v41, 0
    %v200 = vsel %vm189, %v42, 0
    %202 = vmatpush.msra.mxu0 0.0
    %203 = vmatpush.msra.mxu0 0.0
    %204 = vmatpush.msra.mxu0 0.0
    %205 = vmatpush.msra.mxu0 0.0
    %206 = vmatpush.msra.mxu0 0.0
    %207 = vmatpush.msra.mxu0 0.0
    %208 = vmatpush.msra.mxu0 0.0
    %209 = vmatpush.msra.mxu0 0.0
    %210 = vmatpush.msra.mxu0 %v164
    %211 = vmatpush.msra.mxu0 %v163
    %212 = vmatpush.msra.mxu0 %v162
    %213 = vmatpush.msra.mxu0 %v161
    %214 = vmatpush.msra.mxu0 %v160
    %215 = vmatpush.msra.mxu0 %v159
    %216 = vmatpush.msra.mxu0 %v158
    %217 = vmatpush.msra.mxu0 %v157
    %218 = vmatmul.f32.gmra.mxu0 %v191
    %v219 = vpop.f32.mrf.mxu0
    %v220 = vadd.f32 %v172, %v219
    %221 = vmatmul.f32.gmra.mxu0 %v194
    %v222 = vpop.f32.mrf.mxu0
    %v223 = vadd.f32 %v177, %v222
    %224 = vmatmul.f32.gmra.mxu0 %v197
    %v225 = vpop.f32.mrf.mxu0
    %v226 = vadd.f32 %v182, %v225
    %227 = vmatmul.f32.gmra.mxu0 %v200
    %v228 = vpop.f32.mrf.mxu0
    %v229 = vadd.f32 %v187, %v228
    %230 = vdwg.mxu0
    %v231 = vmax.f32 %v220, 0.0
    %v232 = vmax.f32 %v223, 0.0
    %v233 = vmax.f32 %v226, 0.0
    %v234 = vmax.f32 %v229, 0.0
    %v235 = vld [vmem:[%s5] sm:$0xff]
    %v236 = vld [vmem:[%s5 + $0x8] sm:$0xff]
    %v237 = vld [vmem:[%s5 + $0x10] sm:$0xff]
    %v238 = vld [vmem:[%s5 + $0x18] sm:$0xff]
    %240 = vset.pattern.permute.xlu0 0
    %241 = vperm.xlu0 %240, %v235
    %v242 = vpop.permute.xlu0 %241
    %245 = vset.pattern.permute.xlu0 0
    %246 = vperm.xlu0 %245, %v236
    %v247 = vpop.permute.xlu0 %246
    %250 = vset.pattern.permute.xlu0 0
    %251 = vperm.xlu0 %250, %v237
    %v252 = vpop.permute.xlu0 %251
    %255 = vset.pattern.permute.xlu0 0
    %256 = vperm.xlu0 %255, %v238
    %v257 = vpop.permute.xlu0 %256
    %v259 = vmul.f32 %v231, %v242
    %v260 = vmul.f32 %v232, %v247
    %v261 = vmul.f32 %v233, %v252
    %v262 = vmul.f32 %v234, %v257
    %v263 = vadd.f32 %v259, %v260
    %v264 = vadd.f32 %v263, %v261
    %v265 = vadd.f32 %v264, %v262
    %v266 = vrot.slane %v265, 4
    %v267 = vadd.f32 %v265, %v266
    %v268 = vrot.slane %v267, 2
    %v269 = vadd.f32 %v267, %v268
    %v270 = vrot.slane %v269, 1
    %v271 = vadd.f32 %v269, %v270
    %v272 = vld [vmem:[#allocation2] sm:$0x1]
    %274 = vset.pattern.permute.xlu0 0
    %275 = vperm.xlu0 %274, %v272
    %v276 = vpop.permute.xlu0 %275
    %v278 = vperm.slane %v276, 0
    %v279 = vadd.f32 %v271, %v278
    %280 = vst [vmem:[#allocation3] sm:$0x1] %v279
    // Predicated region
    $region30: #{tpu_custom_call.1} parent=1 // pred_check
      _
    $region31: #{tpu_custom_call.1} parent=1 // pred_check_branch
      %282 = sbr.rel (0) target = $region33
    $region32: #{tpu_custom_call.1} parent=1 // pred_region
      %284 = vsyncadd [#allocation4], 0
      %s286 = sshll.u32 [#allocation3], 4
      %s287 = int_to_ptr.vmem [resolvable:$true] %s286
      %s288 = sshll.u32 %s7, 4
      %s289 = int_to_ptr.hbm [resolvable:$true] %s288
      %291 = dma.vmem_to_hbm [thread:$0]  %s287, 16, %s289, [#allocation4]
    $region33: #{tpu_custom_call.1} parent=1 // pred_fallthru
      _
    // Predicated region
    $region34: #{tpu_custom_call.1} parent=1 // pred_check
      _
    $region35: #{tpu_custom_call.1} parent=1 // pred_check_branch
      %293 = sbr.rel (0) target = $region37
    $region36: #{tpu_custom_call.1} parent=1 // pred_region
      %295 = dma.done [#allocation4], 16
    $region37: #{tpu_custom_call.1} parent=1 // pred_fallthru
      _
    %296 = vsyncpa [#allocation4], 1

</llo_original>
